<compile_context>
chip_gen: v5e
topology: v5e:2x2
jax: 0.10.0
libtpu: 0.0.40
codegen_flags: <defaults>
</compile_context>

<pallas_src>
import jax
import jax.numpy as jnp
from jax.experimental import pallas as pl
from jax.experimental.pallas import tpu as pltpu

_LANES = 128
_BLOCK_ROWS = 64  # 64 * 128 = 8192 samples per grid step


def _nll_kernel(rs_ref, ev_ref, tri_ref, out_ref, carry_ref, num_ref, den_ref):
    i = pl.program_id(0)

    @pl.when(i == 0)
    def _init():
        carry_ref[...] = jnp.zeros_like(carry_ref)
        num_ref[...] = jnp.zeros_like(num_ref)
        den_ref[...] = jnp.zeros_like(den_ref)

    rs = rs_ref[...]          # (R, 128) f32 sorted (max-shifted) risk scores
    ev = ev_ref[...]          # (R, 128) f32 event indicators (0 on padding)
    tri = tri_ref[...]        # (128, 128) f32 constant, tri[i, j] = (i <= j)
    R = rs.shape[0]

    ex = jnp.exp(rs)                                               # EUP
    # intra-row inclusive prefix sum along the lane axis (MXU):
    row_cs = jnp.dot(ex, tri, preferred_element_type=jnp.float32)  # (R, 128)
    row_tot = jnp.sum(ex, axis=1, keepdims=True)                   # (R, 1)

    # exclusive prefix sum of per-row totals inside this tile (tiny matmul)
    if R == 1:
        row_off = jnp.zeros((1, 1), jnp.float32)
    else:
        ri = jax.lax.broadcasted_iota(jnp.int32, (R, R), 0)
        rj = jax.lax.broadcasted_iota(jnp.int32, (R, R), 1)
        strict_lower = (rj < ri).astype(jnp.float32)               # (R, R), tiny
        row_off = jnp.dot(strict_lower, row_tot,
                          preferred_element_type=jnp.float32)      # (R, 1)

    carry = carry_ref[...]                                         # (1, 1) cross-tile offset
    cs = row_cs + row_off + carry        # global inclusive cumsum of exp(rs)

    uncensored = rs - jnp.log(cs)
    # ev is {0,1}; padded positions have ev == 0 so they contribute nothing.
    censored = jnp.where(ev > 0.5, uncensored, 0.0)

    num_ref[...] = num_ref[...] + jnp.sum(censored, axis=(0, 1), keepdims=True)
    den_ref[...] = den_ref[...] + jnp.sum(ev, axis=(0, 1), keepdims=True)
    carry_ref[...] = carry + jnp.sum(row_tot, axis=(0, 1), keepdims=True)

    @pl.when(i == pl.num_programs(0) - 1)
    def _finalize():
        out_ref[...] = -num_ref[...] / den_ref[...]


def nll_loss(y, y_hat):
    """Pallas implementation of the PyTorch NLLLoss.forward(y, y_hat)."""
    # ---- JAX glue: |y|, event flags, descending sort by |y|, gather ----
    # TODO(synk): argsort/gather has no clean Pallas TPU equivalent; kept in JAX glue.
    T = jnp.abs(y).reshape(-1)
    E = (y > 0).astype(jnp.float32).reshape(-1)
    idx = jnp.argsort(-T)                          # descending order of |y|
    events = E[idx]
    risk_scores = y_hat.reshape(-1)[idx].astype(jnp.float32)

    # max-shift: mathematically a no-op, avoids exp() overflow inside the kernel
    risk_scores = risk_scores - jnp.max(risk_scores)

    n = risk_scores.shape[0]
    rows = pl.cdiv(n, _LANES)
    block_rows = min(_BLOCK_ROWS, rows)
    rows_padded = pl.cdiv(rows, block_rows) * block_rows
    n_pad = rows_padded * _LANES
    pad = n_pad - n

    # Padding sits at the tail of the sorted order, so it never enters the prefix
    # sums of real positions; its event flags are 0, so it never enters the loss.
    rs = jnp.pad(risk_scores, (0, pad)).reshape(rows_padded, _LANES)
    ev = jnp.pad(events, (0, pad)).reshape(rows_padded, _LANES)

    # constant 128x128 upper-triangular mask, hoisted out of the kernel
    tri = (jnp.arange(_LANES)[:, None] <= jnp.arange(_LANES)[None, :]).astype(
        jnp.float32)

    grid = (rows_padded // block_rows,)
    out = pl.pallas_call(
        _nll_kernel,
        out_shape=jax.ShapeDtypeStruct((1, 1), jnp.float32),
        grid_spec=pltpu.PrefetchScalarGridSpec(
            num_scalar_prefetch=0,
            grid=grid,
            in_specs=[
                pl.BlockSpec((block_rows, _LANES), lambda i: (i, 0)),
                pl.BlockSpec((block_rows, _LANES), lambda i: (i, 0)),
                pl.BlockSpec((_LANES, _LANES), lambda i: (0, 0)),
            ],
            out_specs=pl.BlockSpec((1, 1), lambda i: (0, 0)),
            scratch_shapes=[
                pltpu.VMEM((1, 1), jnp.float32),  # running exp-sum carry
                pltpu.VMEM((1, 1), jnp.float32),  # running sum(censored)
                pltpu.VMEM((1, 1), jnp.float32),  # running sum(events)
            ],
        ),
        compiler_params=pltpu.CompilerParams(
            dimension_semantics=("arbitrary",),
        ),
    )(rs, ev, tri)
    return out[0, 0]


def _reference_nll_loss(y, y_hat):
    """Pure-JAX reference mirroring the PyTorch code exactly."""
    T = jnp.abs(y).reshape(-1)
    E = (y > 0).astype(jnp.int32).reshape(-1)
    idx = jnp.argsort(-T)
    events = E[idx].astype(jnp.float32)
    risk_scores = y_hat.reshape(-1)[idx].astype(jnp.float32)
    uncensored = risk_scores - jnp.log(jnp.cumsum(jnp.exp(risk_scores)))
    censored = uncensored * events
    return -jnp.sum(censored) / jnp.sum(events)


if __name__ == "__main__":
    key = jax.random.PRNGKey(0)
    # n=8: tiny, single row; n=1000: multi-row (exercises cross-row offsets);
    # n=9000: multi grid step (exercises the cross-tile scratch carry).
    for n in (8, 1000, 9000):
        key, k1, k2 = jax.random.split(key, 3)
        y = jax.random.normal(k1, (n,), dtype=jnp.float32) * 5.0
        y = y.at[0].set(jnp.abs(y[0]) + 1.0)   # guarantee at least one observed event
        y_hat = jax.random.normal(k2, (n,), dtype=jnp.float32)

        loss = nll_loss(y, y_hat)
        jax.block_until_ready(loss)

        ref = _reference_nll_loss(y, y_hat)
        assert jnp.allclose(loss, ref, rtol=1e-4, atol=1e-4), (n, loss, ref)

    print("KERNEL_OK")
</pallas_src>

<mosaic_0001>
module attributes {stable_mosaic.version = 11 : i64} {
  func.func @_nll_kernel(%arg0: i32, %arg1: memref<1x128xf32, #tpu.memory_space<vmem>>, %arg2: memref<1x128xf32, #tpu.memory_space<vmem>>, %arg3: memref<128x128xf32, #tpu.memory_space<vmem>>, %arg4: memref<1x1xf32, #tpu.memory_space<vmem>>, %arg5: memref<1x1xf32, #tpu.memory_space<vmem>>, %arg6: memref<1x1xf32, #tpu.memory_space<vmem>>, %arg7: memref<1x1xf32, #tpu.memory_space<vmem>>) attributes {dimension_semantics = [#tpu.dimension_semantics<arbitrary>], iteration_bounds = array<i64: 1>, scalar_prefetch = 0 : i64, scratch_operands = 3 : i64, tpu.core_type = #tpu.core_type<tc>, window_params = [{transform_indices = @transform_0, window_bounds = array<i64: 1, 128>}, {transform_indices = @transform_1, window_bounds = array<i64: 1, 128>}, {pipeline_mode = #tpu.pipeline_mode<synchronous>, transform_indices = @transform_2, window_bounds = array<i64: 128, 128>}, {pipeline_mode = #tpu.pipeline_mode<synchronous>, transform_indices = @transform_3, window_bounds = array<i64: 1, 1>}]} {
    %c0_i32 = arith.constant 0 : i32
    %0 = arith.cmpi eq, %arg0, %c0_i32 : i32
    %1 = arith.extui %0 : i1 to i32
    %c0_i32_0 = arith.constant 0 : i32
    %2 = arith.cmpi ne, %1, %c0_i32_0 : i32
    scf.if %2 {
      %cst_27 = arith.constant 0.000000e+00 : f32
      %48 = vector.broadcast %cst_27 : f32 to vector<1x1xf32>
      %c0_28 = arith.constant 0 : index
      %c0_29 = arith.constant 0 : index
      %49 = vector.load %arg5[%c0_28, %c0_29] : memref<1x1xf32, #tpu.memory_space<vmem>>, vector<1x1xf32>
      tpu.vector_store %arg5[%c0_28, %c0_29], %48 {strides = array<i32>} : memref<1x1xf32, #tpu.memory_space<vmem>>, vector<1x1xf32>,
      %cst_30 = arith.constant 0.000000e+00 : f32
      %50 = vector.broadcast %cst_30 : f32 to vector<1x1xf32>
      %c0_31 = arith.constant 0 : index
      %c0_32 = arith.constant 0 : index
      %51 = vector.load %arg6[%c0_31, %c0_32] : memref<1x1xf32, #tpu.memory_space<vmem>>, vector<1x1xf32>
      tpu.vector_store %arg6[%c0_31, %c0_32], %50 {strides = array<i32>} : memref<1x1xf32, #tpu.memory_space<vmem>>, vector<1x1xf32>,
      %cst_33 = arith.constant 0.000000e+00 : f32
      %52 = vector.broadcast %cst_33 : f32 to vector<1x1xf32>
      %c0_34 = arith.constant 0 : index
      %c0_35 = arith.constant 0 : index
      %53 = vector.load %arg7[%c0_34, %c0_35] : memref<1x1xf32, #tpu.memory_space<vmem>>, vector<1x1xf32>
      tpu.vector_store %arg7[%c0_34, %c0_35], %52 {strides = array<i32>} : memref<1x1xf32, #tpu.memory_space<vmem>>, vector<1x1xf32>,
    } else {
    }
    %c0 = arith.constant 0 : index
    %c0_1 = arith.constant 0 : index
    %3 = vector.load %arg1[%c0, %c0_1] : memref<1x128xf32, #tpu.memory_space<vmem>>, vector<1x128xf32>
    %c0_2 = arith.constant 0 : index
    %c0_3 = arith.constant 0 : index
    %4 = vector.load %arg2[%c0_2, %c0_3] : memref<1x128xf32, #tpu.memory_space<vmem>>, vector<1x128xf32>
    %c0_4 = arith.constant 0 : index
    %c0_5 = arith.constant 0 : index
    %5 = vector.load %arg3[%c0_4, %c0_5] : memref<128x128xf32, #tpu.memory_space<vmem>>, vector<128x128xf32>
    %6 = math.exp %3 : vector<1x128xf32>
    %cst = arith.constant dense<0.000000e+00> : vector<1x128xf32>
    %7 = tpu.matmul %6, %5, %cst {dimension_numbers = #tpu.dot_dimension_numbers<[1], [0], [0], [1], [0, 0, 1, 1], [], []>} : vector<1x128xf32>, vector<128x128xf32>, vector<1x128xf32> -> vector<1x128xf32>
    %cst_6 = arith.constant dense<0.000000e+00> : vector<1xf32>
    %8 = vector.multi_reduction <add>, %6, %cst_6 [1] : vector<1x128xf32> to vector<1xf32>
    %9 = vector.shape_cast %8 : vector<1xf32> to vector<1x1xf32>
    %cst_7 = arith.constant 0.000000e+00 : f32
    %10 = vector.broadcast %cst_7 : f32 to vector<1x1xf32>
    %c0_8 = arith.constant 0 : index
    %c0_9 = arith.constant 0 : index
    %11 = vector.load %arg5[%c0_8, %c0_9] : memref<1x1xf32, #tpu.memory_space<vmem>>, vector<1x1xf32>
    %12 = vector.broadcast %10 : vector<1x1xf32> to vector<1x128xf32>
    %13 = arith.addf %7, %12 : vector<1x128xf32>
    %14 = vector.broadcast %11 : vector<1x1xf32> to vector<1x128xf32>
    %15 = arith.addf %13, %14 : vector<1x128xf32>
    %16 = math.log %15 : vector<1x128xf32>
    %17 = arith.subf %3, %16 : vector<1x128xf32>
    %cst_10 = arith.constant 5.000000e-01 : f32
    %18 = vector.broadcast %cst_10 : f32 to vector<1x128xf32>
    %19 = arith.cmpf ogt, %4, %18 : vector<1x128xf32>
    %cst_11 = arith.constant 0.000000e+00 : f32
    %20 = vector.broadcast %cst_11 : f32 to vector<1x128xf32>
    %21 = arith.select %19, %17, %20 : vector<1x128xi1>, vector<1x128xf32>
    %c0_12 = arith.constant 0 : index
    %c0_13 = arith.constant 0 : index
    %22 = vector.load %arg6[%c0_12, %c0_13] : memref<1x1xf32, #tpu.memory_space<vmem>>, vector<1x1xf32>
    %23 = vector.shape_cast %21 : vector<1x128xf32> to vector<1x1x128xf32>
    %cst_14 = arith.constant dense<0.000000e+00> : vector<1xf32>
    %24 = vector.multi_reduction <add>, %23, %cst_14 [1, 2] : vector<1x1x128xf32> to vector<1xf32>
    %25 = vector.shape_cast %24 : vector<1xf32> to vector<1x1x1xf32>
    %26 = vector.extract %25[0, 0, 0] : f32 from vector<1x1x1xf32>
    %27 = vector.broadcast %26 : f32 to vector<1x1xf32>
    %28 = arith.addf %22, %27 : vector<1x1xf32>
    %c0_15 = arith.constant 0 : index
    %c0_16 = arith.constant 0 : index
    %29 = vector.load %arg6[%c0_15, %c0_16] : memref<1x1xf32, #tpu.memory_space<vmem>>, vector<1x1xf32>
    tpu.vector_store %arg6[%c0_15, %c0_16], %28 {strides = array<i32>} : memref<1x1xf32, #tpu.memory_space<vmem>>, vector<1x1xf32>,
    %c0_17 = arith.constant 0 : index
    %c0_18 = arith.constant 0 : index
    %30 = vector.load %arg7[%c0_17, %c0_18] : memref<1x1xf32, #tpu.memory_space<vmem>>, vector<1x1xf32>
    %31 = vector.shape_cast %4 : vector<1x128xf32> to vector<1x1x128xf32>
    %cst_19 = arith.constant dense<0.000000e+00> : vector<1xf32>
    %32 = vector.multi_reduction <add>, %31, %cst_19 [1, 2] : vector<1x1x128xf32> to vector<1xf32>
    %33 = vector.shape_cast %32 : vector<1xf32> to vector<1x1x1xf32>
    %34 = vector.extract %33[0, 0, 0] : f32 from vector<1x1x1xf32>
    %35 = vector.broadcast %34 : f32 to vector<1x1xf32>
    %36 = arith.addf %30, %35 : vector<1x1xf32>
    %c0_20 = arith.constant 0 : index
    %c0_21 = arith.constant 0 : index
    %37 = vector.load %arg7[%c0_20, %c0_21] : memref<1x1xf32, #tpu.memory_space<vmem>>, vector<1x1xf32>
    tpu.vector_store %arg7[%c0_20, %c0_21], %36 {strides = array<i32>} : memref<1x1xf32, #tpu.memory_space<vmem>>, vector<1x1xf32>,
    %38 = vector.shape_cast %9 : vector<1x1xf32> to vector<1x1x1xf32>
    %cst_22 = arith.constant dense<0.000000e+00> : vector<1xf32>
    %39 = vector.multi_reduction <add>, %38, %cst_22 [1, 2] : vector<1x1x1xf32> to vector<1xf32>
    %40 = vector.shape_cast %39 : vector<1xf32> to vector<1x1x1xf32>
    %41 = vector.extract %40[0, 0, 0] : f32 from vector<1x1x1xf32>
    %42 = vector.broadcast %41 : f32 to vector<1x1xf32>
    %43 = arith.addf %11, %42 : vector<1x1xf32>
    %c0_23 = arith.constant 0 : index
    %c0_24 = arith.constant 0 : index
    %44 = vector.load %arg5[%c0_23, %c0_24] : memref<1x1xf32, #tpu.memory_space<vmem>>, vector<1x1xf32>
    tpu.vector_store %arg5[%c0_23, %c0_24], %43 {strides = array<i32>} : memref<1x1xf32, #tpu.memory_space<vmem>>, vector<1x1xf32>,
    %c0_i32_25 = arith.constant 0 : i32
    %45 = arith.cmpi eq, %arg0, %c0_i32_25 : i32
    %46 = arith.extui %45 : i1 to i32
    %c0_i32_26 = arith.constant 0 : i32
    %47 = arith.cmpi ne, %46, %c0_i32_26 : i32
    scf.if %47 {
      %c0_27 = arith.constant 0 : index
      %c0_28 = arith.constant 0 : index
      %48 = vector.load %arg6[%c0_27, %c0_28] : memref<1x1xf32, #tpu.memory_space<vmem>>, vector<1x1xf32>
      %cst_29 = arith.constant 0.000000e+00 : f32
      %49 = vector.broadcast %cst_29 : f32 to vector<1x1xf32>
      %50 = arith.subf %49, %48 : vector<1x1xf32>
      %c0_30 = arith.constant 0 : index
      %c0_31 = arith.constant 0 : index
      %51 = vector.load %arg7[%c0_30, %c0_31] : memref<1x1xf32, #tpu.memory_space<vmem>>, vector<1x1xf32>
      %52 = arith.divf %50, %51 : vector<1x1xf32>
      %c0_32 = arith.constant 0 : index
      %c0_33 = arith.constant 0 : index
      %53 = vector.load %arg4[%c0_32, %c0_33] : memref<1x1xf32, #tpu.memory_space<vmem>>, vector<1x1xf32>
      tpu.vector_store %arg4[%c0_32, %c0_33], %52 {strides = array<i32>} : memref<1x1xf32, #tpu.memory_space<vmem>>, vector<1x1xf32>,
    } else {
    }
    return
  }
  func.func @transform_0(%arg0: i32) -> (i32, i32) {
    %c0_i32 = arith.constant 0 : i32
    %c0_i32_0 = arith.constant 0 : i32
    return %arg0, %c0_i32 : i32, i32
  }
  func.func @transform_1(%arg0: i32) -> (i32, i32) {
    %c0_i32 = arith.constant 0 : i32
    %c0_i32_0 = arith.constant 0 : i32
    return %arg0, %c0_i32 : i32, i32
  }
  func.func @transform_2(%arg0: i32) -> (i32, i32) {
    %c0_i32 = arith.constant 0 : i32
    %c0_i32_0 = arith.constant 0 : i32
    %c0_i32_1 = arith.constant 0 : i32
    return %c0_i32, %c0_i32_0 : i32, i32
  }
  func.func @transform_3(%arg0: i32) -> (i32, i32) {
    %c0_i32 = arith.constant 0 : i32
    %c0_i32_0 = arith.constant 0 : i32
    %c0_i32_1 = arith.constant 0 : i32
    return %c0_i32, %c0_i32_0 : i32, i32
  }
}

</mosaic_0001>

<llo_original>
// kernel: tpu_custom_call.1
$region0: #{tpu_custom_call.1}
  #allocation0 [shape = 'u32[]', space=smem, size = 0x4, offset = 0x4, fixed_abs, tag = 'smem constant byte address 0x4 - core index']
  #allocation1 [shape = 'u32[72,128]{1,0:T(1,128)}', space=vmem, size = 0x9000, scoped, tag = 'internal scratch']
  #allocation2 [shape = 'f32[1,1]{1,0:T(1,128)}', space=vmem, size = 0x200, scoped, tag = 'scratch operand']
  #allocation3 [shape = 'f32[1,1]{1,0:T(1,128)}', space=vmem, size = 0x200, scoped, tag = 'scratch operand']
  #allocation4 [shape = 'f32[1,1]{1,0:T(1,128)}', space=vmem, size = 0x200, scoped, tag = 'scratch operand']
  %s0 = inlined_call_operand.hbm [shape: f32[1,128], index: 0, kind: input, shape index: {}]
  %s1 = inlined_call_operand.hbm [shape: f32[1,128], index: 1, kind: input, shape index: {}]
  %s2 = inlined_call_operand.hbm [shape: f32[128,128], index: 2, kind: input, shape index: {}]
  %s3 = inlined_call_operand.hbm [shape: f32[1,1], index: 3, kind: output, shape index: {}]
  %s4 = sld [smem:[#allocation0]]
  $region42: #{tpu_custom_call.1} parent=0
    _
  %s6 = ssub.s32 1, %s4
  %s7 = scalar_select 0, %s6, %s4
  $region1: #{tpu_custom_call.1} parent=0
    #allocation5 [shape = 'u8[512]{0}', space=vmem, size = 0x400, scoped, tag = 'input window, operand 0, single buffered']
    #allocation6 [shape = 's32[1]{0}', space=sflag, size = 0x4, scoped, tag = 'scoped memory for tpu_custom_call.1']
    #allocation7 [shape = 's32[1]{0}', space=sflag, size = 0x4, scoped, tag = 'scoped memory for tpu_custom_call.1']
    #allocation8 [shape = 'u8[512]{0}', space=vmem, size = 0x400, scoped, tag = 'input window, operand 1, single buffered']
    #allocation9 [shape = 's32[1]{0}', space=sflag, size = 0x4, scoped, tag = 'scoped memory for tpu_custom_call.1']
    #allocation10 [shape = 'u8[65536]{0}', space=vmem, size = 0x10000, scoped, tag = 'input window, operand 2, single buffered']
    #allocation11 [shape = 'u8[512]{0}', space=vmem, size = 0x400, scoped, tag = 'output window, operand 0, single buffered']
    %8 = vsyncpa [#allocation6], 0
    %9 = vsyncpa [#allocation9], 0
    %10 = vsyncpa [#allocation7], 0
    // Predicated region
    $region2: #{tpu_custom_call.1} parent=1 // pred_check
      _
    $region3: #{tpu_custom_call.1} parent=1 // pred_check_branch
      %12 = sbr.rel (0) target = $region5
    $region4: #{tpu_custom_call.1} parent=1 // pred_region
      %14 = vsyncadd [#allocation6], 0
      %s16 = sshll.u32 %s0, 4
      %s17 = int_to_ptr.hbm [resolvable:$true] %s16
      %s18 = sshll.u32 [#allocation5], 4
      %s19 = int_to_ptr.vmem [resolvable:$true] %s18
      %21 = dma.hbm_to_vmem [thread:$0]  %s17, 16, %s19, [#allocation6]
    $region5: #{tpu_custom_call.1} parent=1 // pred_fallthru
      _
    // Predicated region
    $region6: #{tpu_custom_call.1} parent=1 // pred_check
      _
    $region7: #{tpu_custom_call.1} parent=1 // pred_check_branch
      %23 = sbr.rel (0) target = $region9
    $region8: #{tpu_custom_call.1} parent=1 // pred_region
      %25 = vsyncadd [#allocation9], 0
      %s27 = sshll.u32 %s1, 4
      %s28 = int_to_ptr.hbm [resolvable:$true] %s27
      %s29 = sshll.u32 [#allocation8], 4
      %s30 = int_to_ptr.vmem [resolvable:$true] %s29
      %32 = dma.hbm_to_vmem [thread:$0]  %s28, 16, %s30, [#allocation9]
    $region9: #{tpu_custom_call.1} parent=1 // pred_fallthru
      _
    // Predicated region
    $region10: #{tpu_custom_call.1} parent=1 // pred_check
      _
    $region11: #{tpu_custom_call.1} parent=1 // pred_check_branch
      %34 = sbr.rel (0) target = $region13
    $region12: #{tpu_custom_call.1} parent=1 // pred_region
      %36 = vsyncadd [#allocation9], 0
      %s37 = sshll.u32 %s2, 4
      %s38 = int_to_ptr.hbm [resolvable:$true] %s37
      %s39 = sshll.u32 [#allocation10], 4
      %s40 = int_to_ptr.vmem [resolvable:$true] %s39
      %45 = dma.hbm_to_vmem [thread:$0]  %s38, 2048, %s40, [#allocation9], 128, 128, 8
    $region13: #{tpu_custom_call.1} parent=1 // pred_fallthru
      _
    // Predicated region
    $region14: #{tpu_custom_call.1} parent=1 // pred_check
      _
    $region15: #{tpu_custom_call.1} parent=1 // pred_check_branch
      %47 = sbr.rel (0) target = $region17
    $region16: #{tpu_custom_call.1} parent=1 // pred_region
      %49 = dma.done [#allocation6], 16
    $region17: #{tpu_custom_call.1} parent=1 // pred_fallthru
      _
    // Predicated region
    $region18: #{tpu_custom_call.1} parent=1 // pred_check
      _
    $region19: #{tpu_custom_call.1} parent=1 // pred_check_branch
      %51 = sbr.rel (0) target = $region21
    $region20: #{tpu_custom_call.1} parent=1 // pred_region
      %53 = dma.done [#allocation9], 16
    $region21: #{tpu_custom_call.1} parent=1 // pred_fallthru
      _
    // Predicated region
    $region22: #{tpu_custom_call.1} parent=1 // pred_check
      _
    $region23: #{tpu_custom_call.1} parent=1 // pred_check_branch
      %55 = sbr.rel (0) target = $region25
    $region24: #{tpu_custom_call.1} parent=1 // pred_region
      %57 = dma.done [#allocation9], 2048
    $region25: #{tpu_custom_call.1} parent=1 // pred_fallthru
      _
    %p58 = scmp.eq.s32.totalorder 0, 0
    // Predicated region
    $region26: #{tpu_custom_call.1} parent=1 // pred_check
      %p59 = pneg %p58
    $region27: #{tpu_custom_call.1} parent=1 // pred_check_branch
      %61 = sbr.rel (%p59) target = $region29
    $region28: #{tpu_custom_call.1} parent=1 // pred_region
      %vm62 = vcmask 0
      %63 = vst.msk [vmem:[#allocation2] sm:$0x1] %vm62, 0.0
      %64 = vst.msk [vmem:[#allocation3] sm:$0x1] %vm62, 0.0
      %65 = vst.msk [vmem:[#allocation4] sm:$0x1] %vm62, 0.0
    $region29: #{tpu_custom_call.1} parent=1 // pred_fallthru
      _
    %v66 = vld [vmem:[#allocation5] sm:$0x1]
    %v67 = vld [vmem:[#allocation8] sm:$0x1]
    %v68 = vld [vmem:[#allocation10] sm:$0xff]
    %v69 = vld [vmem:[#allocation10 + $0x8] sm:$0xff]
    %v70 = vld [vmem:[#allocation10 + $0x10] sm:$0xff]
    %v71 = vld [vmem:[#allocation10 + $0x18] sm:$0xff]
    %v72 = vld [vmem:[#allocation10 + $0x20] sm:$0xff]
    %v73 = vld [vmem:[#allocation10 + $0x28] sm:$0xff]
    %v74 = vld [vmem:[#allocation10 + $0x30] sm:$0xff]
    %v75 = vld [vmem:[#allocation10 + $0x38] sm:$0xff]
    %v76 = vld [vmem:[#allocation10 + $0x40] sm:$0xff]
    %v77 = vld [vmem:[#allocation10 + $0x48] sm:$0xff]
    %v78 = vld [vmem:[#allocation10 + $0x50] sm:$0xff]
    %v79 = vld [vmem:[#allocation10 + $0x58] sm:$0xff]
    %v80 = vld [vmem:[#allocation10 + $0x60] sm:$0xff]
    %v81 = vld [vmem:[#allocation10 + $0x68] sm:$0xff]
    %v82 = vld [vmem:[#allocation10 + $0x70] sm:$0xff]
    %v83 = vld [vmem:[#allocation10 + $0x78] sm:$0xff]
    %v84 = vmul.f32 %v66, 1.442695
    %v85 = vpow.pop %v84
    %vm86 = vcmask 1040384
    %v87 = vsel %vm86, %v85, 0.0
    %88 = vadd.xlane.f32.xlu0 %v87
    %v89 = vpop.xlane.xlu0 %88
    %v90 = vld [vmem:[#allocation2] sm:$0x1]
    %92 = vset.pattern.permute.xlu0 0
    %93 = vperm.xlu0 %92, %v90
    %v94 = vpop.permute.xlu0 %93
    %v96 = vperm.slane %v94, 0
    %97 = vmatpush.msra.mxu0 %v83
    %98 = vmatpush.msra.mxu0 %v82
    %99 = vmatpush.msra.mxu0 %v81
    %100 = vmatpush.msra.mxu0 %v80
    %101 = vmatpush.msra.mxu0 %v79
    %102 = vmatpush.msra.mxu0 %v78
    %103 = vmatpush.msra.mxu0 %v77
    %104 = vmatpush.msra.mxu0 %v76
    %105 = vmatpush.msra.mxu0 %v75
    %106 = vmatpush.msra.mxu0 %v74
    %107 = vmatpush.msra.mxu0 %v73
    %108 = vmatpush.msra.mxu0 %v72
    %109 = vmatpush.msra.mxu0 %v71
    %110 = vmatpush.msra.mxu0 %v70
    %111 = vmatpush.msra.mxu0 %v69
    %112 = vmatpush.msra.mxu0 %v68
    %113 = vmatmul.f32.gmra.mxu0 %v85
    %v114 = vpop.f32.mrf.mxu0
    %v115 = vadd.f32 %v96, %v114
    %116 = vdwg.mxu0
    %v117 = vlog2.pop %v115
    %v118 = vmul.f32 %v117, 0.6931472
    %v119 = vsub.f32 %v66, %v118
    %vm120 = vcmp.gt.f32.partialorder %v67, 0.5
    %v121 = vsel %vm120, %v119, 0.0
    %v122 = vld [vmem:[#allocation3] sm:$0x1]
    %v123 = vsel %vm86, %v121, 0.0
    %124 = vadd.xlane.f32.xlu0 %v123
    %v125 = vpop.xlane.xlu0 %124
    %v126 = vrot.slane %v125, 4
    %v127 = vadd.f32 %v125, %v126
    %v128 = vrot.slane %v127, 2
    %v129 = vadd.f32 %v127, %v128
    %v130 = vrot.slane %v129, 1
    %v131 = vadd.f32 %v129, %v130
    %s132 = vtos %v131
    %v133 = vstv %s132
    %v134 = vadd.f32 %v122, %v133
    %vm135 = vcmask 0
    %136 = vst.msk [vmem:[#allocation3] sm:$0x1] %vm135, %v134
    %v137 = vld [vmem:[#allocation4] sm:$0x1]
    %v138 = vsel %vm86, %v67, 0.0
    %139 = vadd.xlane.f32.xlu0 %v138
    %v140 = vpop.xlane.xlu0 %139
    %v141 = vrot.slane %v140, 4
    %v142 = vadd.f32 %v140, %v141
    %v143 = vrot.slane %v142, 2
    %v144 = vadd.f32 %v142, %v143
    %v145 = vrot.slane %v144, 1
    %v146 = vadd.f32 %v144, %v145
    %s147 = vtos %v146
    %v148 = vstv %s147
    %v149 = vadd.f32 %v137, %v148
    %150 = vst.msk [vmem:[#allocation4] sm:$0x1] %vm135, %v149
    %v151 = vadd.f32 %v89, 0.0
    %s152 = vtos %v151
    %v153 = vstv %s152
    %v154 = vadd.f32 %v90, %v153
    %155 = vst.msk [vmem:[#allocation2] sm:$0x1] %vm135, %v154
    // Predicated region
    $region30: #{tpu_custom_call.1} parent=1 // pred_check
      %p156 = pneg %p58
    $region31: #{tpu_custom_call.1} parent=1 // pred_check_branch
      %158 = sbr.rel (%p156) target = $region33
    $region32: #{tpu_custom_call.1} parent=1 // pred_region
      %v159 = vld [vmem:[#allocation3] sm:$0x1]
      %v160 = vsub.f32 0.0, %v159
      %v161 = vld [vmem:[#allocation4] sm:$0x1]
      %v162 = vrcp.pop %v161
      %v163 = vmul.f32 %v161, %v162
      %v164 = vsub.f32 1.0, %v163
      %v165 = vmul.f32 %v162, %v164
      %v166 = vadd.f32 %v162, %v165
      %vm167 = vweird.f32 %v161
      %vm168 = vweird.f32 %v162
      %vm169 = vmor %vm167, %vm168
      %v170 = vsel %vm169, %v162, %v166
      %v171 = vand.u32 2147483647, %v161
      %vm172 = vcmp.eq.f32.partialorder %v171, 8.507059e+37
      %v173 = vand.u32 %v161, 2147483648
      %v174 = vor.u32 1.1754944e-38, %v173
      %v175 = vsel %vm172, %v174, %v170
      %v176 = vmul.f32 %v160, %v175
      %177 = vst.msk [vmem:[#allocation11] sm:$0x1] %vm135, %v176
    $region33: #{tpu_custom_call.1} parent=1 // pred_fallthru
      _
    // Predicated region
    $region34: #{tpu_custom_call.1} parent=1 // pred_check
      _
    $region35: #{tpu_custom_call.1} parent=1 // pred_check_branch
      %179 = sbr.rel (0) target = $region37
    $region36: #{tpu_custom_call.1} parent=1 // pred_region
      %181 = vsyncadd [#allocation7], 0
      %s183 = sshll.u32 [#allocation11], 4
      %s184 = int_to_ptr.vmem [resolvable:$true] %s183
      %s185 = sshll.u32 %s3, 4
      %s186 = int_to_ptr.hbm [resolvable:$true] %s185
      %188 = dma.vmem_to_hbm [thread:$0]  %s184, 16, %s186, [#allocation7]
    $region37: #{tpu_custom_call.1} parent=1 // pred_fallthru
      _
    // Predicated region
    $region38: #{tpu_custom_call.1} parent=1 // pred_check
      _
    $region39: #{tpu_custom_call.1} parent=1 // pred_check_branch
      %190 = sbr.rel (0) target = $region41
    $region40: #{tpu_custom_call.1} parent=1 // pred_region
      %192 = dma.done [#allocation7], 16
    $region41: #{tpu_custom_call.1} parent=1 // pred_fallthru
      _
    %193 = vsyncpa [#allocation6], 1
    %194 = vsyncpa [#allocation9], 1
    %195 = vsyncpa [#allocation7], 1

</llo_original>
